<compile_context>
chip_gen: v7x
topology: tpu7x:2x2x1
jax: 0.10.0
libtpu: 0.0.40
codegen_flags: <defaults>
</compile_context>

<pallas_src>
import math

import jax
import jax.numpy as jnp
from jax.experimental import pallas as pl
from jax.experimental.pallas import tpu as pltpu

_LANE = 128
_MAX_LANES = 1024                        # slab / block width (lane-dense)
_TARGET_BLOCK_BYTES = 2 * 1024 * 1024    # ~2 MiB blocks: safe on v5e/v6e/v7x


def _round_up(x: int, m: int) -> int:
    return ((x + m - 1) // m) * m


def _sublane_mult(dtype) -> int:
    # f32 -> 8, bf16/f16 -> 16, int8/fp8 -> 32 (sub-32-bit packs along sublanes)
    itemsize = jnp.dtype(dtype).itemsize
    return max(8, 32 // itemsize)


def _copy_kernel(x_ref, o_ref):
    # Identity copy of the current tile (the whole "compute" of Flatten).
    o_ref[...] = x_ref[...]


def _pallas_copy_slab(x2d: jax.Array) -> jax.Array:
    """Copy a lane-dense 2D slab (R, C) through VMEM with a tiled Pallas kernel.

    C must be a multiple of 128 and <= _MAX_LANES (guaranteed by the caller).
    R may be arbitrary: the row axis is tiled with pl.cdiv and the boundary
    block is masked by Pallas.
    """
    R, C = x2d.shape
    dtype = x2d.dtype
    itemsize = jnp.dtype(dtype).itemsize
    sub = _sublane_mult(dtype)

    bc = C  # already lane-dense and capped at _MAX_LANES
    rows_for_target = (_TARGET_BLOCK_BYTES // (bc * itemsize)) // sub * sub
    br = min(R, max(sub, rows_for_target))
    # br is either a multiple of the sublane packing or equal to the full R
    # extent, so the (8,128) block-shape constraint is always satisfied.

    grid = (pl.cdiv(R, br), pl.cdiv(C, bc))

    return pl.pallas_call(
        _copy_kernel,
        out_shape=jax.ShapeDtypeStruct((R, C), dtype),
        grid_spec=pltpu.PrefetchScalarGridSpec(
            num_scalar_prefetch=0,
            grid=grid,
            in_specs=[pl.BlockSpec((br, bc), lambda i, j: (i, j))],
            out_specs=pl.BlockSpec((br, bc), lambda i, j: (i, j)),
        ),
        compiler_params=pltpu.CompilerParams(
            dimension_semantics=("parallel", "parallel"),
        ),
        cost_estimate=pl.CostEstimate(
            flops=0,
            transcendentals=0,
            bytes_accessed=2 * R * C * itemsize,
        ),
    )(x2d)


def _lane_dense_divisor(n: int) -> int:
    """Largest multiple of 128 (<= _MAX_LANES) that divides n, or 0 if none."""
    if n % _LANE != 0:
        return 0
    for c in range(_MAX_LANES, 0, -_LANE):
        if n % c == 0:
            return c
    return 0


class Flatten:
    """JAX/Pallas equivalent of the PyTorch Flatten module."""

    def __init__(self, start_dim: int = 1, end_dim: int = -1) -> None:
        self.start_dim = start_dim
        self.end_dim = end_dim

    def __call__(self, x: jax.Array) -> jax.Array:
        rank = len(x.shape)
        end = (rank - 1 if self.end_dim == -1 else self.end_dim) + 1
        start = self.start_dim

        kept_front = x.shape[:start]
        flattened = x.shape[start:end]
        kept_back = x.shape[end:]

        flat_size = math.prod(flattened) if flattened else 1
        new_shape = (*kept_front, flat_size, *kept_back)

        n = int(math.prod(x.shape)) if x.shape else 1
        if n == 0:
            # Nothing to move; metadata-only reshape.
            return jnp.reshape(x, new_shape)

        x_flat = jnp.reshape(x, (n,))  # metadata-only on a contiguous array

        C = _lane_dense_divisor(n)
        if C:
            # Common fast path: no padding, no post-slice -- the Pallas copy is
            # the only HBM traffic.
            R = n // C
            y2d = _pallas_copy_slab(jnp.reshape(x_flat, (R, C)))
            y_flat = jnp.reshape(y2d, (n,))
        else:
            # Rare path (n not a multiple of 128): pad the element stream up to
            # a lane-dense slab, copy, then slice the padding back off.
            C = min(_MAX_LANES, _round_up(n, _LANE))
            R = pl.cdiv(n, C)
            pad = R * C - n
            x_pad = jnp.pad(x_flat, (0, pad)) if pad else x_flat
            y2d = _pallas_copy_slab(jnp.reshape(x_pad, (R, C)))
            y_flat = jnp.reshape(y2d, (R * C,))[:n]

        # Metadata-only reshape to the final Flatten output shape.
        return jnp.reshape(y_flat, new_shape)


if __name__ == "__main__":
    key = jax.random.PRNGKey(0)
    # Small NCHW conv-style input: batch=2, channels=4, spatial=16x16.
    x = jax.random.normal(key, (2, 4, 16, 16), dtype=jnp.float32)

    flatten = Flatten(start_dim=1, end_dim=-1)
    y = jax.block_until_ready(flatten(x))

    ref = jnp.reshape(x, (2, 4 * 16 * 16))
    assert y.shape == (2, 1024), y.shape
    assert y.dtype == x.dtype
    assert bool(jnp.array_equal(y, ref))

    # Partial flatten (start_dim=1, end_dim=2).
    flatten_partial = Flatten(start_dim=1, end_dim=2)
    y2 = jax.block_until_ready(flatten_partial(x))
    ref2 = jnp.reshape(x, (2, 4 * 16, 16))
    assert y2.shape == (2, 64, 16), y2.shape
    assert bool(jnp.array_equal(y2, ref2))

    # Non-128-multiple element count exercises the padded fallback path.
    x3 = jax.random.normal(jax.random.PRNGKey(1), (3, 5, 7), dtype=jnp.float32)
    y3 = jax.block_until_ready(Flatten(start_dim=1, end_dim=-1)(x3))
    ref3 = jnp.reshape(x3, (3, 35))
    assert y3.shape == (3, 35), y3.shape
    assert bool(jnp.array_equal(y3, ref3))

    print("KERNEL_OK")
</pallas_src>

<mosaic_0001>
module attributes {stable_mosaic.version = 11 : i64} {
  func.func @_copy_kernel(%arg0: i32, %arg1: i32, %arg2: memref<2x1024xf32, #tpu.memory_space<vmem>>, %arg3: memref<2x1024xf32, #tpu.memory_space<vmem>>) attributes {dimension_semantics = [#tpu.dimension_semantics<parallel>, #tpu.dimension_semantics<parallel>], iteration_bounds = array<i64: 1, 1>, scalar_prefetch = 0 : i64, scratch_operands = 0 : i64, tpu.core_type = #tpu.core_type<tc>, window_params = [{transform_indices = @transform_0, window_bounds = array<i64: 2, 1024>}, {transform_indices = @transform_1, window_bounds = array<i64: 2, 1024>}]} {
    %c0 = arith.constant 0 : index
    %c0_0 = arith.constant 0 : index
    %0 = vector.load %arg2[%c0, %c0_0] : memref<2x1024xf32, #tpu.memory_space<vmem>>, vector<2x1024xf32>
    %c0_1 = arith.constant 0 : index
    %c0_2 = arith.constant 0 : index
    %1 = vector.load %arg3[%c0_1, %c0_2] : memref<2x1024xf32, #tpu.memory_space<vmem>>, vector<2x1024xf32>
    tpu.vector_store %arg3[%c0_1, %c0_2], %0 {strides = array<i32>} : memref<2x1024xf32, #tpu.memory_space<vmem>>, vector<2x1024xf32>,
    return
  }
  func.func @transform_0(%arg0: i32, %arg1: i32) -> (i32, i32) {
    %c0_i32 = arith.constant 0 : i32
    return %arg0, %arg1 : i32, i32
  }
  func.func @transform_1(%arg0: i32, %arg1: i32) -> (i32, i32) {
    %c0_i32 = arith.constant 0 : i32
    return %arg0, %arg1 : i32, i32
  }
}

</mosaic_0001>

<llo_original>
// kernel: tpu_custom_call.1
$region0: #{tpu_custom_call.1}
  #allocation0 [shape = 'u32[]', space=smem, size = 0x4, offset = 0x4, fixed_abs, tag = 'smem constant byte address 0x4 - core index']
  #allocation1 [shape = 'u32[144,128]{1,0:T(1,128)}', space=vmem, size = 0x12000, scoped, tag = 'internal scratch']
  %s0 = inlined_call_operand.hbm [shape: f32[2,1024], index: 0, kind: input, shape index: {}]
  %s1 = inlined_call_operand.hbm [shape: f32[2,1024], index: 1, kind: output, shape index: {}]
  %s2 = sld [smem:[#allocation0]]
  $region18: #{tpu_custom_call.1} parent=0
    _
  %s4 = ssub.s32 1, %s2
  %s5 = scalar_select 0, %s4, %s2
  $region1: #{tpu_custom_call.1} parent=0
    #allocation2 [shape = 'u8[8192]{0}', space=vmem, size = 0x2000, scoped, tag = 'input window, operand 0, single buffered']
    #allocation3 [shape = 's32[1]{0}', space=sflag, size = 0x4, scoped, tag = 'scoped memory for tpu_custom_call.1']
    #allocation4 [shape = 's32[1]{0}', space=sflag, size = 0x4, scoped, tag = 'scoped memory for tpu_custom_call.1']
    #allocation5 [shape = 'u8[8192]{0}', space=vmem, size = 0x2000, scoped, tag = 'output window, operand 0, single buffered']
    %6 = vsyncpa [#allocation3], 0
    %7 = vsyncpa [#allocation4], 0
    // Predicated region
    $region2: #{tpu_custom_call.1} parent=1 // pred_check
      _
    $region3: #{tpu_custom_call.1} parent=1 // pred_check_branch
      %9 = sbr.rel (0) target = $region5
    $region4: #{tpu_custom_call.1} parent=1 // pred_region
      %s11 = ssub.s32 256, 256
      %12 = vsyncadd [#allocation3], %s11
      %s14 = sshll.u32 [#allocation2], 4
      %s15 = int_to_ptr.vmem [resolvable:$true] %s14
      %17 = dma.hbm_to_vmem [thread:$0]  %s0, 256, %s15, [#allocation3]
    $region5: #{tpu_custom_call.1} parent=1 // pred_fallthru
      _
    // Predicated region
    $region6: #{tpu_custom_call.1} parent=1 // pred_check
      _
    $region7: #{tpu_custom_call.1} parent=1 // pred_check_branch
      %19 = sbr.rel (0) target = $region9
    $region8: #{tpu_custom_call.1} parent=1 // pred_region
      %20 = dma.done [#allocation3], 256
    $region9: #{tpu_custom_call.1} parent=1 // pred_fallthru
      _
    %v21 = vld [vmem:[#allocation2] sm:$0xff]
    %v22 = vld [vmem:[#allocation2 + $0x8] sm:$0xff]
    %23 = vst [vmem:[#allocation5] sm:$0xff] %v21
    %24 = vst [vmem:[#allocation5 + $0x8] sm:$0xff] %v22
    // Predicated region
    $region10: #{tpu_custom_call.1} parent=1 // pred_check
      _
    $region11: #{tpu_custom_call.1} parent=1 // pred_check_branch
      %26 = sbr.rel (0) target = $region13
    $region12: #{tpu_custom_call.1} parent=1 // pred_region
      %s28 = ssub.s32 256, 256
      %29 = vsyncadd [#allocation4], %s28
      %s31 = sshll.u32 [#allocation5], 4
      %s32 = int_to_ptr.vmem [resolvable:$true] %s31
      %34 = dma.vmem_to_hbm [thread:$0]  %s32, 256, %s1, [#allocation4]
    $region13: #{tpu_custom_call.1} parent=1 // pred_fallthru
      _
    // Predicated region
    $region14: #{tpu_custom_call.1} parent=1 // pred_check
      _
    $region15: #{tpu_custom_call.1} parent=1 // pred_check_branch
      %36 = sbr.rel (0) target = $region17
    $region16: #{tpu_custom_call.1} parent=1 // pred_region
      %37 = dma.done [#allocation4], 256
    $region17: #{tpu_custom_call.1} parent=1 // pred_fallthru
      _
    %38 = vsyncpa [#allocation3], 1
    %39 = vsyncpa [#allocation4], 1

</llo_original>
